<compile_context>
chip_gen: v5e
topology: v5e:2x2
jax: 0.10.0
libtpu: 0.0.40
codegen_flags: <defaults>
</compile_context>

<pallas_src>
import functools

import jax
import jax.numpy as jnp
from jax.experimental import pallas as pl
from jax.experimental.pallas import tpu as pltpu


def _ce2d_kernel(x_ref, t_ref, loss_ref, cnt_ref, *, ignore_label, hw, j_inner):
    # x_ref:    (C, TP)  logits tile (classes on sublanes, pixels on lanes)
    # t_ref:    (1, TP)  int32 labels (lane-dense)
    # loss_ref: (1, TP)  f32 running loss accumulator for this (batch, super-block)
    # cnt_ref:  (1, TP)  f32 running valid-pixel count accumulator
    p = pl.program_id(1)
    j = pl.program_id(2)

    @pl.when(j == 0)
    def _():
        loss_ref[...] = jnp.zeros_like(loss_ref)
        cnt_ref[...] = jnp.zeros_like(cnt_ref)

    logits = x_ref[...].astype(jnp.float32)                    # (C, TP)
    t = t_ref[...]                                             # (1, TP) int32
    c, tp = logits.shape

    # Ragged / beyond-the-end masking (no wrapper-side padding copies).  The
    # index_map clamps out-of-range tile indices to a valid block, but the
    # *unclamped* global position computed here makes those lanes invalid, so
    # whatever data was loaded contributes exactly 0.
    lane = jax.lax.broadcasted_iota(jnp.int32, (1, tp), 1)     # (1, TP)
    pos = (p * j_inner + j) * tp + lane
    in_range = pos < hw

    # NOTE: labels with 0 <= t != ignore_label but t >= C are treated as valid
    # with picked = 0 (PyTorch would raise); documented semantic difference.
    valid = jnp.logical_and(jnp.logical_and(t >= 0, t != ignore_label),
                            in_range)                           # (1, TP) bool

    # One pass over the shifted logits: reuse `shifted` for both exp() and the
    # one-hot target gather: loss = log(sum exp(shifted)) - shifted[target].
    m = jnp.max(logits, axis=0, keepdims=True)                  # (1, TP)
    shifted = logits - m                                        # (C, TP)
    sumexp = jnp.sum(jnp.exp(shifted), axis=0, keepdims=True)   # (1, TP)
    class_iota = jax.lax.broadcasted_iota(jnp.int32, (c, tp), 0)
    picked_shifted = jnp.sum(jnp.where(class_iota == t, shifted, 0.0),
                             axis=0, keepdims=True)             # (1, TP)

    # Keep the select (NOT multiply-by-mask): garbage lanes may hold inf/NaN.
    per_pixel = jnp.where(valid, jnp.log(sumexp) - picked_shifted, 0.0)

    # Lane-dense accumulation into the resident output blocks — no per-step
    # cross-lane reduction, no sub-lane-width stores.
    loss_ref[...] += per_pixel
    cnt_ref[...] += valid.astype(jnp.float32)


def _vmem_limit_bytes():
    """Generation-aware scoped-VMEM limit (v7x: 64 MiB physical, v5e/v6e: 128)."""
    phys = None
    try:
        phys = getattr(pltpu.get_tpu_info(), "vmem_capacity_bytes", None)
    except Exception:
        phys = None
    if phys is not None and phys > 64 * 1024 * 1024:
        return 80 * 1024 * 1024       # 128 MiB-class chips: grow tiles freely
    return 44 * 1024 * 1024           # 64 MiB-class chips (and safe fallback)


def _pick_pixel_tile(hw, c, in_itemsize, vmem_budget_bytes, *, tp_max=65536):
    """Largest lane-tile (multiple of 128) fitting the VMEM budget.

    Per lane we account for:
      * 2x double-buffered logits input:        2 * C * in_itemsize
      * 2x double-buffered int32 labels:        2 * 4
      * 2 outputs x 2 buffers x f32:            2 * 2 * 4
      * ~4 live (C, TP) f32/i32 body temporaries (f32 cast, shifted, exp,
        one-hot select / class iota):           4 * 4 * C
      * a handful of (1, TP) f32 temporaries:   8 * 4
    """
    per_lane = 2 * c * in_itemsize + 2 * 4 + 2 * 2 * 4 + 4 * 4 * c + 8 * 4
    cap = max(128, (vmem_budget_bytes // per_lane) // 128 * 128)
    hw_up = pl.cdiv(hw, 128) * 128
    return max(128, min(tp_max, cap, hw_up))


def cross_entropy_2d(predict, target, *, ignore_label=255, size_average=True,
                     weight=None, tp=None):
    """predict: (N, C, H, W) float; target: (N, H, W) int. Returns scalar loss."""
    # TODO(synk): per-class `weight` rescaling not implemented (weight=None path only).
    assert weight is None
    n, c, h, w = predict.shape
    assert target.shape == (n, h, w)
    hw = h * w

    # Pure reshapes — no transpose, no pad, no extra HBM copies.
    x = predict.reshape(n, c, hw)                      # (N, C, HW)
    # Labels stay int32: downcasting (int8/int16) would shave <=20% of HBM
    # bytes for tiny C but risks aliasing out-of-range label values.
    t = target.reshape(n, 1, hw).astype(jnp.int32)     # (N, 1, HW)

    vmem_limit = _vmem_limit_bytes()
    if tp is None:
        # ~70% of the scoped limit for tile sizing; the rest is compiler headroom.
        tp = _pick_pixel_tile(hw, c, predict.dtype.itemsize,
                              (vmem_limit * 7) // 10)

    num_tiles = pl.cdiv(hw, tp)
    # Megacore (v7x): when N alone can't be split evenly across 2 TensorCores,
    # add a second parallel axis over pixel super-blocks.  Harmless on 1-TC chips.
    p_outer = 2 if (n % 2 == 1 and num_tiles >= 2) else 1
    j_inner = pl.cdiv(num_tiles, p_outer)
    last_tile = num_tiles - 1

    def _tile_idx(p, j):
        # Clamp so a (possibly empty) tail super-block never indexes a block
        # fully past the array; its lanes are masked in-kernel anyway.
        return jnp.minimum(p * j_inner + j, last_tile)

    kern = functools.partial(_ce2d_kernel, ignore_label=ignore_label, hw=hw,
                             j_inner=j_inner)

    cost = pl.CostEstimate(
        flops=7 * n * c * hw,
        transcendentals=n * c * hw + n * hw,
        bytes_accessed=n * c * hw * predict.dtype.itemsize + n * hw * 4,
    )

    loss_parts, cnt_parts = pl.pallas_call(
        kern,
        out_shape=(jax.ShapeDtypeStruct((n * p_outer, 1, tp), jnp.float32),
                   jax.ShapeDtypeStruct((n * p_outer, 1, tp), jnp.float32)),
        grid_spec=pltpu.PrefetchScalarGridSpec(
            num_scalar_prefetch=0,
            grid=(n, p_outer, j_inner),
            in_specs=[
                pl.BlockSpec((None, c, tp),
                             lambda ni, p, j: (ni, 0, _tile_idx(p, j))),
                pl.BlockSpec((None, 1, tp),
                             lambda ni, p, j: (ni, 0, _tile_idx(p, j))),
            ],
            out_specs=(
                pl.BlockSpec((None, 1, tp),
                             lambda ni, p, j: (ni * p_outer + p, 0, 0)),
                pl.BlockSpec((None, 1, tp),
                             lambda ni, p, j: (ni * p_outer + p, 0, 0)),
            )),
        compiler_params=pltpu.CompilerParams(
            dimension_semantics=("parallel", "parallel", "arbitrary"),
            vmem_limit_bytes=vmem_limit),
        cost_estimate=cost,
    )(x, t)

    total = jnp.sum(loss_parts)
    count = jnp.sum(cnt_parts)
    if size_average:
        return jnp.where(count > 0, total / jnp.maximum(count, 1.0), 0.0)
    return jnp.where(count > 0, total, 0.0)


def _reference_ce2d(predict, target, ignore_label=255, size_average=True):
    n, c, h, w = predict.shape
    x = jnp.transpose(predict, (0, 2, 3, 1)).reshape(-1, c).astype(jnp.float32)
    t = target.reshape(-1).astype(jnp.int32)
    valid = jnp.logical_and(t >= 0, t != ignore_label)
    logp = jax.nn.log_softmax(x, axis=-1)
    picked = jnp.take_along_axis(logp, jnp.clip(t, 0, c - 1)[:, None], axis=-1)[:, 0]
    losses = jnp.where(valid, -picked, 0.0)
    cnt = jnp.sum(valid.astype(jnp.float32))
    total = jnp.sum(losses)
    if size_average:
        return jnp.where(cnt > 0, total / jnp.maximum(cnt, 1.0), 0.0)
    return jnp.where(cnt > 0, total, 0.0)


if __name__ == "__main__":
    key = jax.random.PRNGKey(0)
    k1, k2, k3, k4, k5, k6 = jax.random.split(key, 6)

    # Test 1: small shapes consistent with the module (batch=2, C=4, 16x16).
    N, C, H, W = 2, 4, 16, 16
    predict = jax.random.normal(k1, (N, C, H, W), dtype=jnp.float32)
    target = jax.random.randint(k2, (N, H, W), 0, C).astype(jnp.int32)
    ignore_mask = jax.random.uniform(k3, (N, H, W)) < 0.2
    target = jnp.where(ignore_mask, 255, target)

    loss = jax.block_until_ready(
        cross_entropy_2d(predict, target, ignore_label=255, size_average=True))
    ref = _reference_ce2d(predict, target, ignore_label=255)
    assert jnp.allclose(loss, ref, atol=1e-5, rtol=1e-5), (loss, ref)

    # Test 2: odd batch + ragged pixel tiles with an explicit small tile —
    # exercises the megacore super-block split, the clamped tail tile and the
    # in-kernel ragged-lane masking.
    N2, C2, H2, W2 = 3, 5, 10, 26
    predict2 = jax.random.normal(k4, (N2, C2, H2, W2), dtype=jnp.float32)
    target2 = jax.random.randint(k5, (N2, H2, W2), 0, C2).astype(jnp.int32)
    ignore_mask2 = jax.random.uniform(k6, (N2, H2, W2)) < 0.3
    target2 = jnp.where(ignore_mask2, 255, target2)

    loss2 = jax.block_until_ready(
        cross_entropy_2d(predict2, target2, ignore_label=255, tp=128))
    ref2 = _reference_ce2d(predict2, target2, ignore_label=255)
    assert jnp.allclose(loss2, ref2, atol=1e-5, rtol=1e-5), (loss2, ref2)

    print("KERNEL_OK")
</pallas_src>

<mosaic_0001>
module attributes {stable_mosaic.version = 11 : i64} {
  func.func @_ce2d_kernel(%arg0: i32, %arg1: i32, %arg2: i32, %arg3: memref<1x4x256xf32, #tpu.memory_space<vmem>>, %arg4: memref<1x1x256xi32, #tpu.memory_space<vmem>>, %arg5: memref<1x1x256xf32, #tpu.memory_space<vmem>>, %arg6: memref<1x1x256xf32, #tpu.memory_space<vmem>>) attributes {dimension_semantics = [#tpu.dimension_semantics<parallel>, #tpu.dimension_semantics<parallel>, #tpu.dimension_semantics<arbitrary>], iteration_bounds = array<i64: 2, 1, 1>, scalar_prefetch = 0 : i64, scratch_operands = 0 : i64, tpu.core_type = #tpu.core_type<tc>, window_params = [{transform_indices = @transform_0, window_bounds = array<i64: 1, 4, 256>}, {transform_indices = @transform_1, window_bounds = array<i64: 1, 1, 256>}, {transform_indices = @transform_2, window_bounds = array<i64: 1, 1, 256>}, {transform_indices = @transform_3, window_bounds = array<i64: 1, 1, 256>}]} {
    %c0_i32 = arith.constant 0 : i32
    %0 = arith.cmpi eq, %arg2, %c0_i32 : i32
    %1 = arith.extui %0 : i1 to i32
    %c0_i32_0 = arith.constant 0 : i32
    %2 = arith.cmpi ne, %1, %c0_i32_0 : i32
    scf.if %2 {
      %cst_24 = arith.constant 0.000000e+00 : f32
      %53 = vector.broadcast %cst_24 : f32 to vector<1x256xf32>
      %c0_25 = arith.constant 0 : index
      %c0_26 = arith.constant 0 : index
      %c0_27 = arith.constant 0 : index
      %54 = vector.load %arg5[%c0_25, %c0_26, %c0_27] : memref<1x1x256xf32, #tpu.memory_space<vmem>>, vector<1x1x256xf32>
      %55 = vector.shape_cast %54 : vector<1x1x256xf32> to vector<1x256xf32>
      %56 = vector.shape_cast %53 : vector<1x256xf32> to vector<1x1x256xf32>
      tpu.vector_store %arg5[%c0_25, %c0_26, %c0_27], %56 {strides = array<i32>} : memref<1x1x256xf32, #tpu.memory_space<vmem>>, vector<1x1x256xf32>,
      %cst_28 = arith.constant 0.000000e+00 : f32
      %57 = vector.broadcast %cst_28 : f32 to vector<1x256xf32>
      %c0_29 = arith.constant 0 : index
      %c0_30 = arith.constant 0 : index
      %c0_31 = arith.constant 0 : index
      %58 = vector.load %arg6[%c0_29, %c0_30, %c0_31] : memref<1x1x256xf32, #tpu.memory_space<vmem>>, vector<1x1x256xf32>
      %59 = vector.shape_cast %58 : vector<1x1x256xf32> to vector<1x256xf32>
      %60 = vector.shape_cast %57 : vector<1x256xf32> to vector<1x1x256xf32>
      tpu.vector_store %arg6[%c0_29, %c0_30, %c0_31], %60 {strides = array<i32>} : memref<1x1x256xf32, #tpu.memory_space<vmem>>, vector<1x1x256xf32>,
    } else {
    }
    %c0 = arith.constant 0 : index
    %c0_1 = arith.constant 0 : index
    %c0_2 = arith.constant 0 : index
    %3 = vector.load %arg3[%c0, %c0_1, %c0_2] : memref<1x4x256xf32, #tpu.memory_space<vmem>>, vector<1x4x256xf32>
    %4 = vector.shape_cast %3 : vector<1x4x256xf32> to vector<4x256xf32>
    %c0_3 = arith.constant 0 : index
    %c0_4 = arith.constant 0 : index
    %c0_5 = arith.constant 0 : index
    %5 = vector.load %arg4[%c0_3, %c0_4, %c0_5] : memref<1x1x256xi32, #tpu.memory_space<vmem>>, vector<1x1x256xi32>
    %6 = vector.shape_cast %5 : vector<1x1x256xi32> to vector<1x256xi32>
    %7 = tpu.iota {dimensions = array<i32: 1>} : vector<1x256xi32>
    %c1_i32 = arith.constant 1 : i32
    %8 = arith.muli %arg1, %c1_i32 : i32
    %9 = arith.addi %8, %arg2 : i32
    %c256_i32 = arith.constant 256 : i32
    %10 = arith.muli %9, %c256_i32 : i32
    %11 = vector.broadcast %10 : i32 to vector<1x256xi32>
    %12 = arith.addi %11, %7 : vector<1x256xi32>
    %c256_i32_6 = arith.constant 256 : i32
    %13 = vector.broadcast %c256_i32_6 : i32 to vector<1x256xi32>
    %14 = arith.cmpi slt, %12, %13 : vector<1x256xi32>
    %c0_i32_7 = arith.constant 0 : i32
    %15 = vector.broadcast %c0_i32_7 : i32 to vector<1x256xi32>
    %16 = arith.cmpi sge, %6, %15 : vector<1x256xi32>
    %c255_i32 = arith.constant 255 : i32
    %17 = vector.broadcast %c255_i32 : i32 to vector<1x256xi32>
    %18 = arith.cmpi ne, %6, %17 : vector<1x256xi32>
    %19 = arith.andi %16, %18 : vector<1x256xi1>
    %20 = arith.andi %19, %14 : vector<1x256xi1>
    %cst = arith.constant dense<0xFF800000> : vector<256xf32>
    %21 = vector.multi_reduction <maximumf>, %4, %cst [0] : vector<4x256xf32> to vector<256xf32>
    %22 = vector.shape_cast %21 : vector<256xf32> to vector<1x256xf32>
    %23 = vector.broadcast %22 : vector<1x256xf32> to vector<4x256xf32>
    %24 = arith.subf %4, %23 : vector<4x256xf32>
    %25 = math.exp %24 : vector<4x256xf32>
    %cst_8 = arith.constant dense<0.000000e+00> : vector<256xf32>
    %26 = vector.multi_reduction <add>, %25, %cst_8 [0] : vector<4x256xf32> to vector<256xf32>
    %27 = vector.shape_cast %26 : vector<256xf32> to vector<1x256xf32>
    %28 = tpu.iota {dimensions = array<i32: 0>} : vector<4x256xi32>
    %29 = vector.broadcast %6 : vector<1x256xi32> to vector<4x256xi32>
    %30 = arith.cmpi eq, %28, %29 : vector<4x256xi32>
    %cst_9 = arith.constant 0.000000e+00 : f32
    %31 = vector.broadcast %cst_9 : f32 to vector<4x256xf32>
    %32 = arith.select %30, %24, %31 : vector<4x256xi1>, vector<4x256xf32>
    %cst_10 = arith.constant dense<0.000000e+00> : vector<256xf32>
    %33 = vector.multi_reduction <add>, %32, %cst_10 [0] : vector<4x256xf32> to vector<256xf32>
    %34 = vector.shape_cast %33 : vector<256xf32> to vector<1x256xf32>
    %35 = math.log %27 : vector<1x256xf32>
    %36 = arith.subf %35, %34 : vector<1x256xf32>
    %cst_11 = arith.constant 0.000000e+00 : f32
    %37 = vector.broadcast %cst_11 : f32 to vector<1x256xf32>
    %38 = arith.select %20, %36, %37 : vector<1x256xi1>, vector<1x256xf32>
    %c0_12 = arith.constant 0 : index
    %c0_13 = arith.constant 0 : index
    %c0_14 = arith.constant 0 : index
    %39 = vector.load %arg5[%c0_12, %c0_13, %c0_14] : memref<1x1x256xf32, #tpu.memory_space<vmem>>, vector<1x1x256xf32>
    %40 = vector.shape_cast %39 : vector<1x1x256xf32> to vector<1x256xf32>
    %41 = arith.addf %40, %38 : vector<1x256xf32>
    %c0_15 = arith.constant 0 : index
    %c0_16 = arith.constant 0 : index
    %c0_17 = arith.constant 0 : index
    %42 = vector.load %arg5[%c0_15, %c0_16, %c0_17] : memref<1x1x256xf32, #tpu.memory_space<vmem>>, vector<1x1x256xf32>
    %43 = vector.shape_cast %42 : vector<1x1x256xf32> to vector<1x256xf32>
    %44 = vector.shape_cast %41 : vector<1x256xf32> to vector<1x1x256xf32>
    tpu.vector_store %arg5[%c0_15, %c0_16, %c0_17], %44 {strides = array<i32>} : memref<1x1x256xf32, #tpu.memory_space<vmem>>, vector<1x1x256xf32>,
    %c0_18 = arith.constant 0 : index
    %c0_19 = arith.constant 0 : index
    %c0_20 = arith.constant 0 : index
    %45 = vector.load %arg6[%c0_18, %c0_19, %c0_20] : memref<1x1x256xf32, #tpu.memory_space<vmem>>, vector<1x1x256xf32>
    %46 = vector.shape_cast %45 : vector<1x1x256xf32> to vector<1x256xf32>
    %47 = arith.extui %20 : vector<1x256xi1> to vector<1x256xi32>
    %48 = arith.sitofp %47 : vector<1x256xi32> to vector<1x256xf32>
    %49 = arith.addf %46, %48 : vector<1x256xf32>
    %c0_21 = arith.constant 0 : index
    %c0_22 = arith.constant 0 : index
    %c0_23 = arith.constant 0 : index
    %50 = vector.load %arg6[%c0_21, %c0_22, %c0_23] : memref<1x1x256xf32, #tpu.memory_space<vmem>>, vector<1x1x256xf32>
    %51 = vector.shape_cast %50 : vector<1x1x256xf32> to vector<1x256xf32>
    %52 = vector.shape_cast %49 : vector<1x256xf32> to vector<1x1x256xf32>
    tpu.vector_store %arg6[%c0_21, %c0_22, %c0_23], %52 {strides = array<i32>} : memref<1x1x256xf32, #tpu.memory_space<vmem>>, vector<1x1x256xf32>,
    return
  }
  func.func @transform_0(%arg0: i32, %arg1: i32, %arg2: i32) -> (i32, i32, i32) {
    %c1_i32 = arith.constant 1 : i32
    %0 = arith.muli %arg1, %c1_i32 : i32
    %1 = arith.addi %0, %arg2 : i32
    %c0_i32 = arith.constant 0 : i32
    %2 = arith.minsi %1, %c0_i32 : i32
    %c0_i32_0 = arith.constant 0 : i32
    %c0_i32_1 = arith.constant 0 : i32
    return %arg0, %c0_i32_0, %2 : i32, i32, i32
  }
  func.func @transform_1(%arg0: i32, %arg1: i32, %arg2: i32) -> (i32, i32, i32) {
    %c1_i32 = arith.constant 1 : i32
    %0 = arith.muli %arg1, %c1_i32 : i32
    %1 = arith.addi %0, %arg2 : i32
    %c0_i32 = arith.constant 0 : i32
    %2 = arith.minsi %1, %c0_i32 : i32
    %c0_i32_0 = arith.constant 0 : i32
    %c0_i32_1 = arith.constant 0 : i32
    return %arg0, %c0_i32_0, %2 : i32, i32, i32
  }
  func.func @transform_2(%arg0: i32, %arg1: i32, %arg2: i32) -> (i32, i32, i32) {
    %c1_i32 = arith.constant 1 : i32
    %0 = arith.muli %arg0, %c1_i32 : i32
    %1 = arith.addi %0, %arg1 : i32
    %c0_i32 = arith.constant 0 : i32
    %c0_i32_0 = arith.constant 0 : i32
    %c0_i32_1 = arith.constant 0 : i32
    return %1, %c0_i32, %c0_i32_0 : i32, i32, i32
  }
  func.func @transform_3(%arg0: i32, %arg1: i32, %arg2: i32) -> (i32, i32, i32) {
    %c1_i32 = arith.constant 1 : i32
    %0 = arith.muli %arg0, %c1_i32 : i32
    %1 = arith.addi %0, %arg1 : i32
    %c0_i32 = arith.constant 0 : i32
    %c0_i32_0 = arith.constant 0 : i32
    %c0_i32_1 = arith.constant 0 : i32
    return %1, %c0_i32, %c0_i32_0 : i32, i32, i32
  }
}

</mosaic_0001>

<llo_original>
// kernel: tpu_custom_call.1
$region0: #{tpu_custom_call.1}
  #allocation0 [shape = 'u32[]', space=smem, size = 0x4, offset = 0x4, fixed_abs, tag = 'smem constant byte address 0x4 - core index']
  #allocation1 [shape = 'u32[72,128]{1,0:T(1,128)}', space=vmem, size = 0x9000, scoped, tag = 'internal scratch']
  %s0 = inlined_call_operand.hbm [shape: f32[2,4,256], index: 0, kind: input, shape index: {}]
  %s1 = inlined_call_operand.hbm [shape: s32[2,1,256], index: 1, kind: input, shape index: {}]
  %s2 = inlined_call_operand.hbm [shape: f32[2,1,256], index: 2, kind: output, shape index: {0}]
  %s3 = inlined_call_operand.hbm [shape: f32[2,1,256], index: 3, kind: output, shape index: {1}]
  %4 = xla_tuple %s2, %s3
  %s5 = sld [smem:[#allocation0]]
  $region61: #{tpu_custom_call.1} parent=0
    _
  %s7 = ssub.s32 1, %s5
  %s8 = scalar_select 0, %s7, %s5
  $region1: #{tpu_custom_call.1} parent=0
    #allocation2 [shape = 'u8[8192]{0}', space=vmem, size = 0x2000, scoped, tag = 'input window, operand 0']
    #allocation3 [shape = 's32[2]{0}', space=sflag, size = 0x8, scoped, tag = 'scoped memory for tpu_custom_call.1']
    #allocation4 [shape = 's32[2]{0}', space=sflag, size = 0x8, scoped, tag = 'scoped memory for tpu_custom_call.1']
    #allocation5 [shape = 'u8[2048]{0}', space=vmem, size = 0x800, scoped, tag = 'input window, operand 1']
    #allocation6 [shape = 's32[2]{0}', space=sflag, size = 0x8, scoped, tag = 'scoped memory for tpu_custom_call.1']
    #allocation7 [shape = 'u8[2048]{0}', space=vmem, size = 0x800, scoped, tag = 'output window, operand 0']
    #allocation8 [shape = 'u8[2048]{0}', space=vmem, size = 0x800, scoped, tag = 'output window, operand 1']
    #allocation9 [shape = 's32[2]{0}', space=sflag, size = 0x8, scoped, tag = 'scoped memory for tpu_custom_call.1']
    %9 = vsyncpa [#allocation3], 0
    %s10 = scalar_lea.sflag [#allocation3], 1
    %11 = vsyncpa %s10, 0
    %12 = vsyncpa [#allocation6], 0
    %s13 = scalar_lea.sflag [#allocation6], 1
    %14 = vsyncpa %s13, 0
    %15 = vsyncpa [#allocation4], 0
    %s16 = scalar_lea.sflag [#allocation4], 1
    %17 = vsyncpa %s16, 0
    %18 = vsyncpa [#allocation9], 0
    %s19 = scalar_lea.sflag [#allocation9], 1
    %20 = vsyncpa %s19, 0
    loop: start=0, step=1, limit=4
    $region2: #{tpu_custom_call.1} parent=1 // loop_pre_header
      _
    $region3: #{tpu_custom_call.1} parent=1 // loop_header
      %s22 = sphi 0, %s26
      %p23 = scmp.ge.s32.totalorder %s22, 4
      %s29 = sphi 0, %s48
      %s30 = sphi 0, %s44
      %s31 = sphi 0, %s40
      %s32 = sphi 0, %s29
      %s33 = sphi 0, %s30
      %s34 = sphi 0, %s31
      %s35 = sphi 0, %s32
      %s36 = sphi 0, %s33
      %s37 = sphi 0, %s34
      %s59 = sphi 0, %s61
      %s62 = sphi 0, %s59
      %s63 = sphi 0, %s62
      %s79 = sphi 0, %s63
      %s93 = sphi 0, %s95
      %s96 = sphi 0, %s93
      %s97 = sphi 0, %s96
      %s113 = sphi 0, %s97
      %s121 = sphi 0, %s123
      %s124 = sphi 0, %s121
      %s125 = sphi 0, %s124
      %s141 = sphi 0, %s125
      %s149 = sphi 0, %s151
      %s152 = sphi 0, %s149
      %s153 = sphi 0, %s152
      %s169 = sphi 0, %s153
    $region4: #{tpu_custom_call.1} parent=1 // loop_header_branch
      %25 = sbr.rel (%p23) target = $region8
    $region5: #{tpu_custom_call.1} parent=1 // loop_body
      %s27 = ssub.s32 %s22, 1
      %s28 = ssub.s32 %s22, 2
      %s38 = sadd.s32 1, %s31
      %p39 = scmp.ge.s32.totalorder %s38, 1
      %s40 = scalar_select %p39, 0, %s38
      %s41 = sadd.s32 1, %s30
      %s42 = scalar_select %p39, %s41, %s30
      %p43 = scmp.ge.s32.totalorder %s42, 1
      %s44 = scalar_select %p43, 0, %s42
      %s45 = sadd.s32 1, %s29
      %s46 = scalar_select %p43, %s45, %s29
      %p47 = scmp.ge.s32.totalorder %s46, 2
      %s48 = scalar_select %p47, 0, %s46
      %s49 = sadd.s32 %s30, %s31
      %p50 = scmp.lt.s32.totalorder %s49, 0
      %s51 = scalar_select %p50, %s49, 0
      %s52 = sadd.s32 %s44, %s40
      %p53 = scmp.lt.s32.totalorder %s52, 0
      %s54 = scalar_select %p53, %s52, 0
      %s55 = ssub.s32 %s29, %s48
      %s56 = ssub.s32 %s51, %s54
      %s57 = sor.u32 %s55, %s56
      %p58 = scmp.eq.s32.totalorder %s57, 0
      %s60 = sadd.s32 %s59, 1
      %s61 = scalar_select %p58, %s59, %s60
      %p64 = pneg %p58
      %p65 = scmp.eq.s32.totalorder %s22, 1
      %p66 = por %p64, %p65
      %p67 = scmp.ne.s32.totalorder %s59, %s62
      %p68 = scmp.eq.s32.totalorder %s22, 0
      %p69 = por %p67, %p68
      %p70 = scmp.ne.s32.totalorder %s59, %s62
      %p71 = scmp.eq.s32.totalorder %s27, 1
      %p72 = por %p70, %p71
      %p73 = scmp.ne.s32.totalorder %s62, %s63
      %p74 = scmp.eq.s32.totalorder %s27, 0
      %p75 = por %p73, %p74
      %p76 = scmp.ne.s32.totalorder %s62, %s63
      %p77 = scmp.eq.s32.totalorder %s28, 1
      %p78 = por %p76, %p77
      %p80 = scmp.ne.s32.totalorder %s63, %s79
      %p81 = scmp.eq.s32.totalorder %s28, 0
      %p82 = por %p80, %p81
      %s83 = sadd.s32 %s30, %s31
      %p84 = scmp.lt.s32.totalorder %s83, 0
      %s85 = scalar_select %p84, %s83, 0
      %s86 = sadd.s32 %s44, %s40
      %p87 = scmp.lt.s32.totalorder %s86, 0
      %s88 = scalar_select %p87, %s86, 0
      %s89 = ssub.s32 %s29, %s48
      %s90 = ssub.s32 %s85, %s88
      %s91 = sor.u32 %s89, %s90
      %p92 = scmp.eq.s32.totalorder %s91, 0
      %s94 = sadd.s32 %s93, 1
      %s95 = scalar_select %p92, %s93, %s94
      %p98 = pneg %p92
      %p99 = scmp.eq.s32.totalorder %s22, 1
      %p100 = por %p98, %p99
      %p101 = scmp.ne.s32.totalorder %s93, %s96
      %p102 = scmp.eq.s32.totalorder %s22, 0
      %p103 = por %p101, %p102
      %p104 = scmp.ne.s32.totalorder %s93, %s96
      %p105 = scmp.eq.s32.totalorder %s27, 1
      %p106 = por %p104, %p105
      %p107 = scmp.ne.s32.totalorder %s96, %s97
      %p108 = scmp.eq.s32.totalorder %s27, 0
      %p109 = por %p107, %p108
      %p110 = scmp.ne.s32.totalorder %s96, %s97
      %p111 = scmp.eq.s32.totalorder %s28, 1
      %p112 = por %p110, %p111
      %p114 = scmp.ne.s32.totalorder %s97, %s113
      %p115 = scmp.eq.s32.totalorder %s28, 0
      %p116 = por %p114, %p115
      %s117 = sadd.s32 %s29, %s30
      %s118 = sadd.s32 %s48, %s44
      %s119 = ssub.s32 %s117, %s118
      %p120 = scmp.eq.s32.totalorder %s119, 0
      %s122 = sadd.s32 %s121, 1
      %s123 = scalar_select %p120, %s121, %s122
      %p126 = pneg %p120
      %p127 = scmp.eq.s32.totalorder %s22, 1
      %p128 = por %p126, %p127
      %p129 = scmp.ne.s32.totalorder %s121, %s124
      %p130 = scmp.eq.s32.totalorder %s22, 0
      %p131 = por %p129, %p130
      %p132 = scmp.ne.s32.totalorder %s121, %s124
      %p133 = scmp.eq.s32.totalorder %s27, 1
      %p134 = por %p132, %p133
      %p135 = scmp.ne.s32.totalorder %s124, %s125
      %p136 = scmp.eq.s32.totalorder %s27, 0
      %p137 = por %p135, %p136
      %p138 = scmp.ne.s32.totalorder %s124, %s125
      %p139 = scmp.eq.s32.totalorder %s28, 1
      %p140 = por %p138, %p139
      %p142 = scmp.ne.s32.totalorder %s125, %s141
      %p143 = scmp.eq.s32.totalorder %s28, 0
      %p144 = por %p142, %p143
      %s145 = sadd.s32 %s29, %s30
      %s146 = sadd.s32 %s48, %s44
      %s147 = ssub.s32 %s145, %s146
      %p148 = scmp.eq.s32.totalorder %s147, 0
      %s150 = sadd.s32 %s149, 1
      %s151 = scalar_select %p148, %s149, %s150
      %p154 = pneg %p148
      %p155 = scmp.eq.s32.totalorder %s22, 1
      %p156 = por %p154, %p155
      %p157 = scmp.ne.s32.totalorder %s149, %s152
      %p158 = scmp.eq.s32.totalorder %s22, 0
      %p159 = por %p157, %p158
      %p160 = scmp.ne.s32.totalorder %s149, %s152
      %p161 = scmp.eq.s32.totalorder %s27, 1
      %p162 = por %p160, %p161
      %p163 = scmp.ne.s32.totalorder %s152, %s153
      %p164 = scmp.eq.s32.totalorder %s27, 0
      %p165 = por %p163, %p164
      %p166 = scmp.ne.s32.totalorder %s152, %s153
      %p167 = scmp.eq.s32.totalorder %s28, 1
      %p168 = por %p166, %p167
      %p170 = scmp.ne.s32.totalorder %s153, %s169
      %p171 = scmp.eq.s32.totalorder %s28, 0
      %p172 = por %p170, %p171
      %p173 = scmp.le.s32.totalorder 1, %s22
      %p174 = scmp.lt.s32.totalorder %s22, 3
      %p175 = pnand %p173, %p174
      %p176 = pneg %p175
      // Predicated region
      $region9: #{tpu_custom_call.1} parent=5 // pred_check
        _
      $region10: #{tpu_custom_call.1} parent=5 // pred_check_branch
        %178 = sbr.rel (%p175) target = $region12
      $region11: #{tpu_custom_call.1} parent=5 // pred_region
        %s179 = ssub.s32 %s22, 1
      $region12: #{tpu_custom_call.1} parent=5 // pred_fallthru
        _
      %p180 = scmp.lt.s32.totalorder %s22, 2
      // Predicated region
      $region13: #{tpu_custom_call.1} parent=5 // pred_check
        %p181 = pneg %p180
      $region14: #{tpu_custom_call.1} parent=5 // pred_check_branch
        %183 = sbr.rel (%p181) target = $region16
      $region15: #{tpu_custom_call.1} parent=5 // pred_region
        // Predicated region
        $region17: #{tpu_custom_call.1} parent=15 // pred_check
          %p184 = pneg %p69
        $region18: #{tpu_custom_call.1} parent=15 // pred_check_branch
          %186 = sbr.rel (%p184) target = $region20
        $region19: #{tpu_custom_call.1} parent=15 // pred_region
          %s187 = sand.u32 %s59, 1
          %s188 = scalar_lea.sflag [#allocation3], %s187
          %s189 = sand.u32 %s59, 1
          %s190 = smul.addr %s189, 8
          %s191 = scalar_lea.vmem [#allocation2], %s190
          %s192 = sadd.s32 %s30, %s31
          %p193 = scmp.lt.s32.totalorder %s192, 0
          %s194 = scalar_select %p193, %s192, 0
          %s195 = smul.u32 2, %s194
          %197 = vsyncadd %s188, 0
          %s198 = smul.addr %s29, 2
          %s199 = sadd.s32 %s195, %s198
          %s200 = smul.addr %s199, 4
          %s201 = scalar_lea.hbm %s0, %s200
          %s203 = sshll.u32 %s201, 4
          %s204 = int_to_ptr.hbm [resolvable:$true] %s203
          %s205 = sshll.u32 %s191, 4
          %s206 = int_to_ptr.vmem [resolvable:$true] %s205
          %208 = dma.hbm_to_vmem [thread:$0]  %s204, 128, %s206, %s188
        $region20: #{tpu_custom_call.1} parent=15 // pred_fallthru
          _
        // Predicated region
        $region21: #{tpu_custom_call.1} parent=15 // pred_check
          %p209 = pneg %p103
        $region22: #{tpu_custom_call.1} parent=15 // pred_check_branch
          %211 = sbr.rel (%p209) target = $region24
        $region23: #{tpu_custom_call.1} parent=15 // pred_region
          %s212 = sand.u32 %s93, 1
          %s213 = scalar_lea.sflag [#allocation6], %s212
          %s214 = sand.u32 %s93, 1
          %s215 = smul.addr %s214, 2
          %s216 = scalar_lea.vmem [#allocation5], %s215
          %s217 = sadd.s32 %s30, %s31
          %p218 = scmp.lt.s32.totalorder %s217, 0
          %s219 = scalar_select %p218, %s217, 0
          %s220 = smul.u32 2, %s219
          %222 = vsyncadd %s213, 0
          %s223 = smul.addr %s29, 2
          %s224 = sadd.s32 %s220, %s223
          %s225 = scalar_lea.hbm %s1, %s224
          %s227 = sshll.u32 %s225, 4
          %s228 = int_to_ptr.hbm [resolvable:$true] %s227
          %s229 = sshll.u32 %s216, 4
          %s230 = int_to_ptr.vmem [resolvable:$true] %s229
          %232 = dma.hbm_to_vmem [thread:$0]  %s228, 32, %s230, %s213
        $region24: #{tpu_custom_call.1} parent=15 // pred_fallthru
          _
      $region16: #{tpu_custom_call.1} parent=5 // pred_fallthru
        _
      %p233 = scmp.le.s32.totalorder 1, %s22
      %p234 = scmp.lt.s32.totalorder %s22, 3
      %p235 = pnand %p233, %p234
      %p236 = pneg %p235
      // Predicated region
      $region25: #{tpu_custom_call.1} parent=5 // pred_check
        _
      $region26: #{tpu_custom_call.1} parent=5 // pred_check_branch
        %238 = sbr.rel (%p235) target = $region28
      $region27: #{tpu_custom_call.1} parent=5 // pred_region
        %s239 = ssub.s32 %s22, 1
        %s240 = sand.u32 %s62, 1
        %s241 = scalar_lea.sflag [#allocation3], %s240
        %s242 = sand.u32 %s62, 1
        %s243 = smul.addr %s242, 8
        %s244 = scalar_lea.vmem [#allocation2], %s243
        // Predicated region
        $region29: #{tpu_custom_call.1} parent=27 // pred_check
          %p245 = pneg %p75
        $region30: #{tpu_custom_call.1} parent=27 // pred_check_branch
          %247 = sbr.rel (%p245) target = $region32
        $region31: #{tpu_custom_call.1} parent=27 // pred_region
          %249 = dma.done %s241, 128
        $region32: #{tpu_custom_call.1} parent=27 // pred_fallthru
          _
        %s250 = sand.u32 %s96, 1
        %s251 = scalar_lea.sflag [#allocation6], %s250
        %s252 = sand.u32 %s96, 1
        %s253 = smul.addr %s252, 2
        %s254 = scalar_lea.vmem [#allocation5], %s253
        // Predicated region
        $region33: #{tpu_custom_call.1} parent=27 // pred_check
          %p255 = pneg %p109
        $region34: #{tpu_custom_call.1} parent=27 // pred_check_branch
          %257 = sbr.rel (%p255) target = $region36
        $region35: #{tpu_custom_call.1} parent=27 // pred_region
          %259 = dma.done %s251, 32
        $region36: #{tpu_custom_call.1} parent=27 // pred_fallthru
          _
        %s260 = sand.u32 %s62, 1
        %s261 = scalar_lea.sflag [#allocation3], %s260
        %s262 = sand.u32 %s62, 1
        %s263 = smul.addr %s262, 8
        %s264 = scalar_lea.vmem [#allocation2], %s263
        %p265 = pneg %p75
        %p266 = pneg %p72
        %s267 = sand.u32 %s96, 1
        %s268 = scalar_lea.sflag [#allocation6], %s267
        %s269 = sand.u32 %s96, 1
        %s270 = smul.addr %s269, 2
        %s271 = scalar_lea.vmem [#allocation5], %s270
        %p272 = pneg %p109
        %p273 = pneg %p106
        %p274 = pneg %p137
        %p275 = pneg %p134
        %s276 = sand.u32 %s124, 1
        %s277 = scalar_lea.sflag [#allocation4], %s276
        %s278 = sand.u32 %s124, 1
        %s279 = smul.addr %s278, 2
        %s280 = scalar_lea.vmem [#allocation7], %s279
        %p281 = pneg %p165
        %p282 = pneg %p162
        %s283 = sand.u32 %s152, 1
        %s284 = scalar_lea.sflag [#allocation9], %s283
        %s285 = sand.u32 %s152, 1
        %s286 = smul.addr %s285, 2
        %s287 = scalar_lea.vmem [#allocation8], %s286
        %s288 = sadd.s32 %s33, %s34
        %p289 = scmp.lt.s32.totalorder %s288, 0
        %s290 = scalar_select %p289, %s288, 0
        %s291 = smul.u32 2, %s290
        %s292 = sadd.s32 %s33, %s34
        %p293 = scmp.lt.s32.totalorder %s292, 0
        %s294 = scalar_select %p293, %s292, 0
        %s295 = smul.u32 2, %s294
        %s296 = sadd.s32 %s32, %s33
        %s297 = sadd.s32 %s32, %s33
        %p298 = scmp.eq.s32.totalorder %s34, 0
        // Predicated region
        $region37: #{tpu_custom_call.1} parent=27 // pred_check
          %p299 = pneg %p298
        $region38: #{tpu_custom_call.1} parent=27 // pred_check_branch
          %301 = sbr.rel (%p299) target = $region40
        $region39: #{tpu_custom_call.1} parent=27 // pred_region
          %v302 = vlaneseq
          %vm303 = vcmp.ge.s32.totalorder %v302, 0
          %vm304 = vcmp.lt.s32.totalorder %v302, 256
          %vm305 = vmand %vm303, %vm304
          %306 = vst.msk [vmem:[%s280] sm:$0x3] %vm305, 0.0
          %307 = vst.msk [vmem:[%s287] sm:$0x3] %vm305, 0.0
        $region40: #{tpu_custom_call.1} parent=27 // pred_fallthru
          _
        %v308 = vld [vmem:[%s244] sm:$0xff]
        %v309 = vld [vmem:[%s254] sm:$0x3]
        %v310 = vlaneseq
        %v311 = vand.u32 %v310, 127
        %v312 = vadd.s32 %v311, 128
        %s313 = sadd.s32 %s33, %s34
        %s314 = smul.u32 %s313, 256
        %v315 = vstv %s314
        %v316 = vadd.s32 %v315, %v311
        %v317 = vadd.s32 %v315, %v312
        %vm318 = vcmp.lt.s32.totalorder %v316, 256
        %vm319 = vcmp.lt.s32.totalorder %v317, 256
        %vm320 = vcmp.ge.s32.totalorder %v309, 0
        %vm321 = vcmp.ne.s32.totalorder %v309, 255
        %vm322 = vmand %vm320, %vm321
        %v323 = vsel %vm318, 1, 0
        %v324 = vsel %vm319, 1, 0
        %v325 = vrot.slane %v324, 7
        %vm326 = vcmask 1040384
        %v327 = vsel %vm326, %v323, %v325
        %vm328 = vcmp.ne.s32.totalorder %v327, 0
        %vm329 = vmand %vm322, %vm328
        %331 = vst [vmem:[#allocation1] ss:$2 sm:$0xff] %v308
        %v332 = vld.sshfl [vmem:[#allocation1] sm:$0xff pattern:$0x75316420]
        %v333 = vld.sshfl [vmem:[#allocation1 + $0x8] sm:$0xff pattern:$0x75316420]
        %vm336 = vcmask 1043456
        %v337 = vsel %vm336, %v332, -inf
        %v338 = vrot.slane %v337, 4
        %v339 = vmax.f32 %v337, %v338
        %v340 = vrot.slane %v339, 2
        %v341 = vmax.f32 %v339, %v340
        %v342 = vrot.slane %v341, 1
        %v343 = vmax.f32 %v341, %v342
        %v344 = vsel %vm336, %v333, -inf
        %v345 = vrot.slane %v344, 4
        %v346 = vmax.f32 %v344, %v345
        %v347 = vrot.slane %v346, 2
        %v348 = vmax.f32 %v346, %v347
        %v349 = vrot.slane %v348, 1
        %v350 = vmax.f32 %v348, %v349
        %v353 = vrot.slane %v350, 4
        %v354 = vsel %vm336, %v343, %v353
        %v356 = vsub.f32 %v308, %v354
        %v357 = vmul.f32 %v356, 1.442695
        %v358 = vpow.pop %v357
        %360 = vst [vmem:[#allocation1] ss:$2 sm:$0xff] %v358
        %v361 = vld.sshfl [vmem:[#allocation1] sm:$0xff pattern:$0x75316420]
        %v362 = vld.sshfl [vmem:[#allocation1 + $0x8] sm:$0xff pattern:$0x75316420]
        %v365 = vsel %vm336, %v361, 0.0
        %v366 = vrot.slane %v365, 4
        %v367 = vadd.f32 %v365, %v366
        %v368 = vrot.slane %v367, 2
        %v369 = vadd.f32 %v367, %v368
        %v370 = vrot.slane %v369, 1
        %v371 = vadd.f32 %v369, %v370
        %v372 = vsel %vm336, %v362, 0.0
        %v373 = vrot.slane %v372, 4
        %v374 = vadd.f32 %v372, %v373
        %v375 = vrot.slane %v374, 2
        %v376 = vadd.f32 %v374, %v375
        %v377 = vrot.slane %v376, 1
        %v378 = vadd.f32 %v376, %v377
        %v379 = vlaneseq
        %v380 = vshrl.u32 %v379, 7
        %v381 = vperm.slane %v309, 0
        %v382 = vperm.slane %v309, 1
        %vm383 = vcmp.eq.s32.totalorder %v380, %v381
        %vm384 = vcmp.eq.s32.totalorder %v380, %v382
        %386 = vst [vmem:[#allocation1] ss:$2 sm:$0xff] %v356
        %v387 = vld.sshfl [vmem:[#allocation1] sm:$0xff pattern:$0x75316420]
        %v388 = vld.sshfl [vmem:[#allocation1 + $0x8] sm:$0xff pattern:$0x75316420]
        %v391 = vsel %vm383, %v387, 0.0
        %v392 = vsel %vm384, %v388, 0.0
        %v393 = vsel %vm336, %v391, 0.0
        %v394 = vrot.slane %v393, 4
        %v395 = vadd.f32 %v393, %v394
        %v396 = vrot.slane %v395, 2
        %v397 = vadd.f32 %v395, %v396
        %v398 = vrot.slane %v397, 1
        %v399 = vadd.f32 %v397, %v398
        %v400 = vsel %vm336, %v392, 0.0
        %v401 = vrot.slane %v400, 4
        %v402 = vadd.f32 %v400, %v401
        %v403 = vrot.slane %v402, 2
        %v404 = vadd.f32 %v402, %v403
        %v405 = vrot.slane %v404, 1
        %v406 = vadd.f32 %v404, %v405
        %v407 = vlog2.pop %v371
        %v408 = vmul.f32 %v407, 0.6931472
        %v409 = vlog2.pop %v378
        %v410 = vmul.f32 %v409, 0.6931472
        %v411 = vsub.f32 %v408, %v399
        %v412 = vsub.f32 %v410, %v406
        %v415 = vrot.slane %v412, 7
        %v416 = vsel %vm326, %v411, %v415
        %v418 = vsel %vm329, %v416, 0.0
        %v419 = vld [vmem:[%s280] sm:$0x3]
        %v420 = vadd.f32 %v419, %v418
        %v421 = vlaneseq
        %vm422 = vcmp.ge.s32.totalorder %v421, 0
        %vm423 = vcmp.lt.s32.totalorder %v421, 256
        %vm424 = vmand %vm422, %vm423
        %425 = vst.msk [vmem:[%s280] sm:$0x3] %vm424, %v420
        %v426 = vld [vmem:[%s287] sm:$0x3]
        %v427 = vsel %vm329, 1, 0
        %v428 = vcvt.s32.f32 %v427
        %v429 = vadd.f32 %v426, %v428
        %430 = vst.msk [vmem:[%s287] sm:$0x3] %vm424, %v429
        %s431 = sand.u32 %s124, 1
        %s432 = scalar_lea.sflag [#allocation4], %s431
        %s433 = sand.u32 %s124, 1
        %s434 = smul.addr %s433, 2
        %s435 = scalar_lea.vmem [#allocation7], %s434
        %s436 = sand.u32 %s152, 1
        %s437 = scalar_lea.sflag [#allocation9], %s436
        %s438 = sand.u32 %s152, 1
        %s439 = smul.addr %s438, 2
        %s440 = scalar_lea.vmem [#allocation8], %s439
        // Predicated region
        $region41: #{tpu_custom_call.1} parent=27 // pred_check
          %p441 = pneg %p134
        $region42: #{tpu_custom_call.1} parent=27 // pred_check_branch
          %443 = sbr.rel (%p441) target = $region44
        $region43: #{tpu_custom_call.1} parent=27 // pred_region
          %s444 = sadd.s32 %s32, %s33
          %446 = vsyncadd %s432, 0
          %s447 = smul.addr %s444, 2
          %s448 = scalar_lea.hbm %s2, %s447
          %s450 = sshll.u32 %s435, 4
          %s451 = int_to_ptr.vmem [resolvable:$true] %s450
          %s452 = sshll.u32 %s448, 4
          %s453 = int_to_ptr.hbm [resolvable:$true] %s452
          %455 = dma.vmem_to_hbm [thread:$0]  %s451, 32, %s453, %s432
        $region44: #{tpu_custom_call.1} parent=27 // pred_fallthru
          _
        // Predicated region
        $region45: #{tpu_custom_call.1} parent=27 // pred_check
          %p456 = pneg %p162
        $region46: #{tpu_custom_call.1} parent=27 // pred_check_branch
          %458 = sbr.rel (%p456) target = $region48
        $region47: #{tpu_custom_call.1} parent=27 // pred_region
          %s459 = sadd.s32 %s32, %s33
          %461 = vsyncadd %s437, 0
          %s462 = smul.addr %s459, 2
          %s463 = scalar_lea.hbm %s3, %s462
          %s465 = sshll.u32 %s440, 4
          %s466 = int_to_ptr.vmem [resolvable:$true] %s465
          %s467 = sshll.u32 %s463, 4
          %s468 = int_to_ptr.hbm [resolvable:$true] %s467
          %470 = dma.vmem_to_hbm [thread:$0]  %s466, 32, %s468, %s437
        $region48: #{tpu_custom_call.1} parent=27 // pred_fallthru
          _
      $region28: #{tpu_custom_call.1} parent=5 // pred_fallthru
        _
      %p471 = scmp.le.s32.totalorder 2, %s22
      // Predicated region
      $region49: #{tpu_custom_call.1} parent=5 // pred_check
        %p472 = pneg %p471
      $region50: #{tpu_custom_call.1} parent=5 // pred_check_branch
        %474 = sbr.rel (%p472) target = $region52
      $region51: #{tpu_custom_call.1} parent=5 // pred_region
        %s475 = ssub.s32 %s22, 2
        // Predicated region
        $region53: #{tpu_custom_call.1} parent=51 // pred_check
          %p476 = pneg %p140
        $region54: #{tpu_custom_call.1} parent=51 // pred_check_branch
          %478 = sbr.rel (%p476) target = $region56
        $region55: #{tpu_custom_call.1} parent=51 // pred_region
          %s479 = sand.u32 %s125, 1
          %s480 = scalar_lea.sflag [#allocation4], %s479
          %s481 = sand.u32 %s125, 1
          %s482 = smul.addr %s481, 2
          %s483 = scalar_lea.vmem [#allocation7], %s482
          %485 = dma.done %s480, 32
        $region56: #{tpu_custom_call.1} parent=51 // pred_fallthru
          _
        // Predicated region
        $region57: #{tpu_custom_call.1} parent=51 // pred_check
          %p486 = pneg %p168
        $region58: #{tpu_custom_call.1} parent=51 // pred_check_branch
          %488 = sbr.rel (%p486) target = $region60
        $region59: #{tpu_custom_call.1} parent=51 // pred_region
          %s489 = sand.u32 %s153, 1
          %s490 = scalar_lea.sflag [#allocation9], %s489
          %s491 = sand.u32 %s153, 1
          %s492 = smul.addr %s491, 2
          %s493 = scalar_lea.vmem [#allocation8], %s492
          %495 = dma.done %s490, 32
        $region60: #{tpu_custom_call.1} parent=51 // pred_fallthru
          _
      $region52: #{tpu_custom_call.1} parent=5 // pred_fallthru
        _
    $region6: #{tpu_custom_call.1} parent=1 // loop_footer
      %s26 = sadd.s32 1, %s22
    $region7: #{tpu_custom_call.1} parent=1 // loop_footer_branch
      %21 = sbr.rel target = $region3
    $region8: #{tpu_custom_call.1} parent=1 // loop_exit
      _
    %496 = vsyncpa [#allocation3], 1
    %s497 = scalar_lea.sflag [#allocation3], 1
    %498 = vsyncpa %s497, 1
    %499 = vsyncpa [#allocation6], 1
    %s500 = scalar_lea.sflag [#allocation6], 1
    %501 = vsyncpa %s500, 1
    %502 = vsyncpa [#allocation4], 1
    %s503 = scalar_lea.sflag [#allocation4], 1
    %504 = vsyncpa %s503, 1
    %505 = vsyncpa [#allocation9], 1
    %s506 = scalar_lea.sflag [#allocation9], 1
    %507 = vsyncpa %s506, 1

</llo_original>
